<compile_context>
chip_gen: v6e
topology: v6e:2x2x1
jax: 0.10.0
libtpu: 0.0.40
codegen_flags: <defaults>
</compile_context>

<pallas_src>
import jax
import jax.numpy as jnp
from jax import lax
from jax.experimental import pallas as pl
from jax.experimental.pallas import tpu as pltpu


def _clip_loss_kernel(zis_ref, zjs_ref, rscale_ref, cscale_ref, stats_ref):
    """One (T, T) tile of the CLIP logits matrix.

    zis_ref:    VMEM (T, D) native dtype  -- row tile i of zis (raw)
    zjs_ref:    VMEM (T, D) native dtype  -- column tile j of zjs (raw)
    rscale_ref: VMEM (T, 1) f32           -- (1/temperature) / ||zis[row]||
    cscale_ref: VMEM (T, 1) f32           -- 1 / ||zjs[col]||
    stats_ref:  VMEM (4, T) f32 per-tile partials:
        row 0: sum_c exp(logits[r, c] - m)   (per tile row r)
        row 1: sum_r exp(logits[r, c] - m)   (per tile column c)
        row 2: m  (tile-wide max, broadcast over T lanes)
        row 3: diagonal partial sum (only nonzero when i == j), broadcast
    """
    i = pl.program_id(0)
    j = pl.program_id(1)
    tile = stats_ref.shape[1]

    # bf16 operands into the MXU, f32 accumulation.  Contract dim 1 of both
    # operands (A @ B^T) so no transposed copy is materialized.
    zi = zis_ref[...].astype(jnp.bfloat16)          # (T, D)
    zj = zjs_ref[...].astype(jnp.bfloat16)          # (T, D)
    raw = lax.dot_general(
        zi, zj,
        dimension_numbers=(((1,), (1,)), ((), ())),
        preferred_element_type=jnp.float32)         # (T, T)

    # Rank-1 normalization / temperature scaling of the tile (precomputed
    # scales; no (B, D) normalized copies in-kernel).
    rscale = rscale_ref[...].astype(jnp.float32)            # (T, 1)
    cscale = cscale_ref[...].astype(jnp.float32).reshape(1, tile)  # (1, T)
    logits = raw * rscale * cscale                           # (T, T)

    # Single exp over the tile against a tile-wide max (logits bounded by
    # +-1/temperature, so this is stable); emit m for exact recombination.
    m = jnp.max(logits)
    e = jnp.exp(logits - m)                                  # (T, T)
    row_se = jnp.sum(e, axis=1)                              # (T,) per row
    col_se = jnp.sum(e, axis=0)                              # (T,) per column

    # Diagonal (labels = arange): global row i*T + r matches global col j*T + r,
    # so only i == j tiles contribute; take it from the computed logits tile.
    rr = lax.broadcasted_iota(jnp.int32, logits.shape, 0)
    cc = lax.broadcasted_iota(jnp.int32, logits.shape, 1)
    diag_tile = jnp.sum(jnp.where(rr == cc, logits, 0.0))
    diag = jnp.where(i == j, diag_tile, 0.0)

    stats_ref[0, :] = row_se
    stats_ref[1, :] = col_se
    stats_ref[2, :] = jnp.full((tile,), m, dtype=jnp.float32)
    stats_ref[3, :] = jnp.full((tile,), diag, dtype=jnp.float32)


def _pick_tile(b, block=None):
    """Tile size for both the row and column axes of the logits matrix."""
    if block is not None:
        assert b % block == 0, "block must divide the batch size"
        return block
    if b <= 256:
        return b
    for t in (256, 128, 64, 32, 16, 8):
        if b % t == 0:
            return t
    # TODO(synk): pad + mask partials for batch sizes with no >=8 divisor
    # instead of falling back to a single (B, B) tile.
    return b


def clip_loss(zis, zjs, temperature, norm=True, block=None):
    """Pallas implementation of ClipLoss.forward.  Returns a scalar f32 loss."""
    assert norm, "only the norm=True path (module default) is implemented"
    B, D = zis.shape
    assert zjs.shape == (B, D)

    T = _pick_tile(B, block)
    ni = nj = B // T

    inv_t = jnp.float32(1.0) / jnp.asarray(temperature, dtype=jnp.float32)
    eps2 = jnp.float32(1e-24)
    # F.normalize(x, p=2, dim=1): x / max(||x||, 1e-12) == x * rsqrt(max(||x||^2, 1e-24))
    zis_ss = jnp.sum(jnp.square(zis.astype(jnp.float32)), axis=1, keepdims=True)  # (B, 1)
    zjs_ss = jnp.sum(jnp.square(zjs.astype(jnp.float32)), axis=1, keepdims=True)  # (B, 1)
    row_scale = lax.rsqrt(jnp.maximum(zis_ss, eps2)) * inv_t   # includes 1/temperature
    col_scale = lax.rsqrt(jnp.maximum(zjs_ss, eps2))

    stats = pl.pallas_call(
        _clip_loss_kernel,
        out_shape=jax.ShapeDtypeStruct((ni, nj, 4, T), jnp.float32),
        grid_spec=pltpu.PrefetchScalarGridSpec(
            num_scalar_prefetch=0,
            grid=(ni, nj),
            in_specs=[
                pl.BlockSpec((T, D), lambda i, j: (i, 0)),   # zis row tile
                pl.BlockSpec((T, D), lambda i, j: (j, 0)),   # zjs column tile
                pl.BlockSpec((T, 1), lambda i, j: (i, 0)),   # row scales
                pl.BlockSpec((T, 1), lambda i, j: (j, 0)),   # column scales
            ],
            out_specs=pl.BlockSpec((None, None, 4, T), lambda i, j: (i, j, 0, 0)),
        ),
        compiler_params=pltpu.CompilerParams(
            dimension_semantics=("parallel", "parallel")),
    )(zis, zjs, row_scale, col_scale)

    # ---- tiny exact cross-tile reduction in plain JAX (O(ni * nj * T)) ----
    row_se = stats[:, :, 0, :]        # (ni, nj, T)
    col_se = stats[:, :, 1, :]        # (ni, nj, T)
    m = stats[:, :, 2, 0]             # (ni, nj)
    diag = stats[:, :, 3, 0]          # (ni, nj), nonzero only on i == j

    mrow = jnp.max(m, axis=1)                                     # (ni,)
    wrow = jnp.exp(m - mrow[:, None])                             # (ni, nj)
    row_sumexp = jnp.sum(row_se * wrow[:, :, None], axis=1)       # (ni, T)
    row_lse_sum = jnp.sum(jnp.log(row_sumexp)) + T * jnp.sum(mrow)

    mcol = jnp.max(m, axis=0)                                     # (nj,)
    wcol = jnp.exp(m - mcol[None, :])                             # (ni, nj)
    col_sumexp = jnp.sum(col_se * wcol[:, :, None], axis=0)       # (nj, T)
    col_lse_sum = jnp.sum(jnp.log(col_sumexp)) + T * jnp.sum(mcol)

    diag_sum = jnp.sum(diag)

    # loss = 0.5*CE(logits, arange) + 0.5*CE(logits.T, arange), mean reduction
    return (0.5 / B) * (row_lse_sum + col_lse_sum - 2.0 * diag_sum)


def _reference_clip_loss(zis, zjs, temperature):
    """Pure-JAX f32 reference mirroring the PyTorch module."""
    def normalize(x):
        n = jnp.maximum(jnp.linalg.norm(x, axis=1, keepdims=True), 1e-12)
        return x / n

    h1 = normalize(zis.astype(jnp.float32))
    h2 = normalize(zjs.astype(jnp.float32))
    logits = (h1 @ h2.T) / temperature

    def ce(lg):
        lse = jax.scipy.special.logsumexp(lg, axis=-1)
        return jnp.mean(lse - jnp.diagonal(lg))

    return 0.5 * ce(logits) + 0.5 * ce(logits.T)


if __name__ == "__main__":
    key = jax.random.PRNGKey(0)
    k1, k2 = jax.random.split(key)
    B, D = 16, 32
    temperature = 0.1

    zis = jax.random.normal(k1, (B, D), dtype=jnp.float32)
    zjs = jax.random.normal(k2, (B, D), dtype=jnp.float32)

    ref = _reference_clip_loss(zis, zjs, temperature)

    # Default tiling (single tile at this small batch).
    loss_single = jax.block_until_ready(clip_loss(zis, zjs, temperature))
    # Forced 2x2 grid to exercise the cross-tile (row/col/diag) recombination.
    loss_tiled = jax.block_until_ready(clip_loss(zis, zjs, temperature, block=8))

    # bf16 MXU operands -> compare against the f32 reference with a modest tol.
    assert jnp.isfinite(loss_single) and jnp.isfinite(loss_tiled)
    assert jnp.allclose(loss_single, ref, atol=3e-2, rtol=3e-2), (loss_single, ref)
    assert jnp.allclose(loss_tiled, ref, atol=3e-2, rtol=3e-2), (loss_tiled, ref)

    print("KERNEL_OK")
</pallas_src>

<mosaic_0001>
module attributes {stable_mosaic.version = 11 : i64} {
  func.func @_clip_loss_kernel(%arg0: i32, %arg1: i32, %arg2: memref<16x32xf32, #tpu.memory_space<vmem>>, %arg3: memref<16x32xf32, #tpu.memory_space<vmem>>, %arg4: memref<16x1xf32, #tpu.memory_space<vmem>>, %arg5: memref<16x1xf32, #tpu.memory_space<vmem>>, %arg6: memref<1x1x4x16xf32, #tpu.memory_space<vmem>>) attributes {dimension_semantics = [#tpu.dimension_semantics<parallel>, #tpu.dimension_semantics<parallel>], iteration_bounds = array<i64: 1, 1>, scalar_prefetch = 0 : i64, scratch_operands = 0 : i64, tpu.core_type = #tpu.core_type<tc>, window_params = [{transform_indices = @transform_0, window_bounds = array<i64: 16, 32>}, {transform_indices = @transform_1, window_bounds = array<i64: 16, 32>}, {transform_indices = @transform_2, window_bounds = array<i64: 16, 1>}, {transform_indices = @transform_3, window_bounds = array<i64: 16, 1>}, {transform_indices = @transform_4, window_bounds = array<i64: 1, 1, 4, 16>}]} {
    %c0 = arith.constant 0 : index
    %c0_0 = arith.constant 0 : index
    %0 = vector.load %arg2[%c0, %c0_0] : memref<16x32xf32, #tpu.memory_space<vmem>>, vector<16x32xf32>
    %1 = arith.truncf %0 : vector<16x32xf32> to vector<16x32xbf16>
    %c0_1 = arith.constant 0 : index
    %c0_2 = arith.constant 0 : index
    %2 = vector.load %arg3[%c0_1, %c0_2] : memref<16x32xf32, #tpu.memory_space<vmem>>, vector<16x32xf32>
    %3 = arith.truncf %2 : vector<16x32xf32> to vector<16x32xbf16>
    %cst = arith.constant dense<0.000000e+00> : vector<16x16xf32>
    %4 = tpu.matmul %1, %3, %cst {dimension_numbers = #tpu.dot_dimension_numbers<[1], [1], [0], [0], [0, 0, 1, 0], [], []>} : vector<16x32xbf16>, vector<16x32xbf16>, vector<16x16xf32> -> vector<16x16xf32>
    %c0_3 = arith.constant 0 : index
    %c0_4 = arith.constant 0 : index
    %5 = vector.load %arg4[%c0_3, %c0_4] : memref<16x1xf32, #tpu.memory_space<vmem>>, vector<16x1xf32>
    %c0_5 = arith.constant 0 : index
    %c0_6 = arith.constant 0 : index
    %6 = vector.load %arg5[%c0_5, %c0_6] : memref<16x1xf32, #tpu.memory_space<vmem>>, vector<16x1xf32>
    %7 = vector.shape_cast %6 : vector<16x1xf32> to vector<1x16xf32>
    %8 = vector.broadcast %5 : vector<16x1xf32> to vector<16x16xf32>
    %9 = arith.mulf %4, %8 : vector<16x16xf32>
    %10 = vector.broadcast %7 : vector<1x16xf32> to vector<16x16xf32>
    %11 = arith.mulf %9, %10 : vector<16x16xf32>
    %12 = vector.shape_cast %11 : vector<16x16xf32> to vector<1x16x16xf32>
    %cst_7 = arith.constant dense<0xFF800000> : vector<1xf32>
    %13 = vector.multi_reduction <maximumf>, %12, %cst_7 [1, 2] : vector<1x16x16xf32> to vector<1xf32>
    %14 = vector.shape_cast %13 : vector<1xf32> to vector<1x1x1xf32>
    %15 = vector.extract %14[0, 0, 0] : f32 from vector<1x1x1xf32>
    %16 = vector.broadcast %15 : f32 to vector<16x16xf32>
    %17 = arith.subf %11, %16 : vector<16x16xf32>
    %18 = math.exp %17 : vector<16x16xf32>
    %cst_8 = arith.constant dense<0.000000e+00> : vector<16xf32>
    %19 = vector.multi_reduction <add>, %18, %cst_8 [1] : vector<16x16xf32> to vector<16xf32>
    %cst_9 = arith.constant dense<0.000000e+00> : vector<16xf32>
    %20 = vector.multi_reduction <add>, %18, %cst_9 [0] : vector<16x16xf32> to vector<16xf32>
    %21 = tpu.iota {dimensions = array<i32: 0>} : vector<16x16xi32>
    %22 = tpu.iota {dimensions = array<i32: 1>} : vector<16x16xi32>
    %23 = arith.cmpi eq, %21, %22 : vector<16x16xi32>
    %cst_10 = arith.constant 0.000000e+00 : f32
    %24 = vector.broadcast %cst_10 : f32 to vector<16x16xf32>
    %25 = arith.select %23, %11, %24 : vector<16x16xi1>, vector<16x16xf32>
    %26 = vector.shape_cast %25 : vector<16x16xf32> to vector<1x16x16xf32>
    %cst_11 = arith.constant dense<0.000000e+00> : vector<1xf32>
    %27 = vector.multi_reduction <add>, %26, %cst_11 [1, 2] : vector<1x16x16xf32> to vector<1xf32>
    %28 = vector.shape_cast %27 : vector<1xf32> to vector<1x1x1xf32>
    %29 = vector.extract %28[0, 0, 0] : f32 from vector<1x1x1xf32>
    %30 = arith.cmpi eq, %arg0, %arg1 : i32
    %cst_12 = arith.constant 0.000000e+00 : f32
    %31 = arith.select %30, %29, %cst_12 : f32
    %c0_13 = arith.constant 0 : index
    %c0_14 = arith.constant 0 : index
    %c0_15 = arith.constant 0 : index
    %c0_16 = arith.constant 0 : index
    %32 = vector.load %arg6[%c0_13, %c0_14, %c0_15, %c0_16] : memref<1x1x4x16xf32, #tpu.memory_space<vmem>>, vector<1x1x1x16xf32>
    %33 = vector.shape_cast %32 : vector<1x1x1x16xf32> to vector<16xf32>
    %34 = vector.shape_cast %19 : vector<16xf32> to vector<1x1x1x16xf32>
    tpu.vector_store %arg6[%c0_13, %c0_14, %c0_15, %c0_16], %34 {strides = array<i32>} : memref<1x1x4x16xf32, #tpu.memory_space<vmem>>, vector<1x1x1x16xf32>,
    %c0_17 = arith.constant 0 : index
    %c0_18 = arith.constant 0 : index
    %c1 = arith.constant 1 : index
    %c0_19 = arith.constant 0 : index
    %35 = vector.load %arg6[%c0_17, %c0_18, %c1, %c0_19] : memref<1x1x4x16xf32, #tpu.memory_space<vmem>>, vector<1x1x1x16xf32>
    %36 = vector.shape_cast %35 : vector<1x1x1x16xf32> to vector<16xf32>
    %37 = vector.shape_cast %20 : vector<16xf32> to vector<1x1x1x16xf32>
    tpu.vector_store %arg6[%c0_17, %c0_18, %c1, %c0_19], %37 {strides = array<i32>} : memref<1x1x4x16xf32, #tpu.memory_space<vmem>>, vector<1x1x1x16xf32>,
    %38 = vector.broadcast %15 : f32 to vector<16xf32>
    %c0_20 = arith.constant 0 : index
    %c0_21 = arith.constant 0 : index
    %c2 = arith.constant 2 : index
    %c0_22 = arith.constant 0 : index
    %39 = vector.load %arg6[%c0_20, %c0_21, %c2, %c0_22] : memref<1x1x4x16xf32, #tpu.memory_space<vmem>>, vector<1x1x1x16xf32>
    %40 = vector.shape_cast %39 : vector<1x1x1x16xf32> to vector<16xf32>
    %41 = vector.shape_cast %38 : vector<16xf32> to vector<1x1x1x16xf32>
    tpu.vector_store %arg6[%c0_20, %c0_21, %c2, %c0_22], %41 {strides = array<i32>} : memref<1x1x4x16xf32, #tpu.memory_space<vmem>>, vector<1x1x1x16xf32>,
    %42 = vector.broadcast %31 : f32 to vector<16xf32>
    %c0_23 = arith.constant 0 : index
    %c0_24 = arith.constant 0 : index
    %c3 = arith.constant 3 : index
    %c0_25 = arith.constant 0 : index
    %43 = vector.load %arg6[%c0_23, %c0_24, %c3, %c0_25] : memref<1x1x4x16xf32, #tpu.memory_space<vmem>>, vector<1x1x1x16xf32>
    %44 = vector.shape_cast %43 : vector<1x1x1x16xf32> to vector<16xf32>
    %45 = vector.shape_cast %42 : vector<16xf32> to vector<1x1x1x16xf32>
    tpu.vector_store %arg6[%c0_23, %c0_24, %c3, %c0_25], %45 {strides = array<i32>} : memref<1x1x4x16xf32, #tpu.memory_space<vmem>>, vector<1x1x1x16xf32>,
    return
  }
  func.func @transform_0(%arg0: i32, %arg1: i32) -> (i32, i32) {
    %c0_i32 = arith.constant 0 : i32
    %c0_i32_0 = arith.constant 0 : i32
    return %arg0, %c0_i32 : i32, i32
  }
  func.func @transform_1(%arg0: i32, %arg1: i32) -> (i32, i32) {
    %c0_i32 = arith.constant 0 : i32
    %c0_i32_0 = arith.constant 0 : i32
    return %arg1, %c0_i32 : i32, i32
  }
  func.func @transform_2(%arg0: i32, %arg1: i32) -> (i32, i32) {
    %c0_i32 = arith.constant 0 : i32
    %c0_i32_0 = arith.constant 0 : i32
    return %arg0, %c0_i32 : i32, i32
  }
  func.func @transform_3(%arg0: i32, %arg1: i32) -> (i32, i32) {
    %c0_i32 = arith.constant 0 : i32
    %c0_i32_0 = arith.constant 0 : i32
    return %arg1, %c0_i32 : i32, i32
  }
  func.func @transform_4(%arg0: i32, %arg1: i32) -> (i32, i32, i32, i32) {
    %c0_i32 = arith.constant 0 : i32
    %c0_i32_0 = arith.constant 0 : i32
    %c0_i32_1 = arith.constant 0 : i32
    return %arg0, %arg1, %c0_i32, %c0_i32_0 : i32, i32, i32, i32
  }
}

</mosaic_0001>

<llo_original>
// kernel: tpu_custom_call.1
$region0: #{tpu_custom_call.1}
  #allocation0 [shape = 'u32[]', space=smem, size = 0x4, offset = 0x4, fixed_abs, tag = 'smem constant byte address 0x4 - core index']
  #allocation1 [shape = 'u32[144,128]{1,0:T(1,128)}', space=vmem, size = 0x12000, scoped, tag = 'internal scratch']
  %s0 = inlined_call_operand.vmem [shape: f32[16,32], index: 0, kind: input, shape index: {}]
  %s1 = inlined_call_operand.vmem [shape: f32[16,32], index: 1, kind: input, shape index: {}]
  %s2 = inlined_call_operand.vmem [shape: f32[16,1], index: 2, kind: input, shape index: {}]
  %s3 = inlined_call_operand.vmem [shape: f32[16,1], index: 3, kind: input, shape index: {}]
  %s4 = inlined_call_operand.hbm [shape: f32[1,1,4,16], index: 4, kind: output, shape index: {}]
  %s5 = sld [smem:[#allocation0]]
  $region26: #{tpu_custom_call.1} parent=0
    _
  %s7 = ssub.s32 1, %s5
  %s8 = scalar_select 0, %s7, %s5
  $region1: #{tpu_custom_call.1} parent=0
    #allocation2 [shape = 'u8[2048]{0}', space=vmem, size = 0x800, scoped, tag = 'output window, operand 0, single buffered']
    #allocation3 [shape = 's32[1]{0}', space=sflag, size = 0x4, scoped, tag = 'scoped memory for tpu_custom_call.1']
    %9 = vsyncpa [#allocation3], 0
    // Predicated region
    $region2: #{tpu_custom_call.1} parent=1 // pred_check
      _
    $region3: #{tpu_custom_call.1} parent=1 // pred_check_branch
      %11 = sbr.rel (0) target = $region5
    $region4: #{tpu_custom_call.1} parent=1 // pred_region
      _
    $region5: #{tpu_custom_call.1} parent=1 // pred_fallthru
      _
    // Predicated region
    $region6: #{tpu_custom_call.1} parent=1 // pred_check
      _
    $region7: #{tpu_custom_call.1} parent=1 // pred_check_branch
      %13 = sbr.rel (0) target = $region9
    $region8: #{tpu_custom_call.1} parent=1 // pred_region
      _
    $region9: #{tpu_custom_call.1} parent=1 // pred_fallthru
      _
    // Predicated region
    $region10: #{tpu_custom_call.1} parent=1 // pred_check
      _
    $region11: #{tpu_custom_call.1} parent=1 // pred_check_branch
      %15 = sbr.rel (0) target = $region13
    $region12: #{tpu_custom_call.1} parent=1 // pred_region
      _
    $region13: #{tpu_custom_call.1} parent=1 // pred_fallthru
      _
    // Predicated region
    $region14: #{tpu_custom_call.1} parent=1 // pred_check
      _
    $region15: #{tpu_custom_call.1} parent=1 // pred_check_branch
      %17 = sbr.rel (0) target = $region17
    $region16: #{tpu_custom_call.1} parent=1 // pred_region
      _
    $region17: #{tpu_custom_call.1} parent=1 // pred_fallthru
      _
    %v19 = vld [vmem:[%s0] sm:$0xff]
    %v20 = vld [vmem:[%s0 + $0x8] sm:$0xff]
    %v21 = vpack.c.bf16 %v20, %v19
    %v22 = vld [vmem:[%s1] sm:$0xff]
    %v23 = vld [vmem:[%s1 + $0x8] sm:$0xff]
    %v24 = vpack.c.bf16 %v23, %v22
    %vm25 = vcmask 261120
    %v27 = vsel %vm25, %v21, 0
    %v30 = vsel %vm25, %v24, 0
    %32 = vmatprep.subr.bf16.mxu0 0
    %33 = vmatpush1.bf16.xpose.msra.mxu0 0
    %34 = vmatprep.subr.bf16.mxu0 0
    %35 = vmatpush1.bf16.xpose.msra.mxu0 0
    %36 = vmatprep.subr.bf16.mxu0 0
    %37 = vmatpush1.bf16.xpose.msra.mxu0 0
    %38 = vmatprep.subr.bf16.mxu0 0
    %39 = vmatpush1.bf16.xpose.msra.mxu0 0
    %40 = vmatprep.subr.bf16.mxu0 0
    %41 = vmatpush1.bf16.xpose.msra.mxu0 0
    %42 = vmatprep.subr.bf16.mxu0 0
    %43 = vmatpush1.bf16.xpose.msra.mxu0 0
    %44 = vmatprep.subr.bf16.mxu0 0
    %45 = vmatpush1.bf16.xpose.msra.mxu0 0
    %46 = vmatprep.subr.bf16.mxu0 0
    %47 = vmatpush1.bf16.xpose.msra.mxu0 %v30
    %48 = vmatprep.subr.bf16.mxu0 0
    %49 = vmatpush2.bf16.xpose.msra.mxu0 0
    %50 = vmatprep.subr.bf16.mxu0 0
    %51 = vmatpush2.bf16.xpose.msra.mxu0 0
    %52 = vmatprep.subr.bf16.mxu0 0
    %53 = vmatpush2.bf16.xpose.msra.mxu0 0
    %54 = vmatprep.subr.bf16.mxu0 0
    %55 = vmatpush2.bf16.xpose.msra.mxu0 0
    %56 = vmatprep.subr.bf16.mxu0 0
    %57 = vmatpush2.bf16.xpose.msra.mxu0 0
    %58 = vmatprep.subr.bf16.mxu0 0
    %59 = vmatpush2.bf16.xpose.msra.mxu0 0
    %60 = vmatprep.subr.bf16.mxu0 0
    %61 = vmatpush2.bf16.xpose.msra.mxu0 0
    %62 = vmatprep.subr.bf16.mxu0 0
    %63 = vmatpush2.bf16.xpose.msra.mxu0 0
    %64 = vmatprep.mubr.bf16.mxu0 0
    %65 = vmatmul.mubr.bf16.gmra.mxu0 %v27
    %v66 = vpop.f32.mrf.mxu0
    %v67 = vadd.f32 0.0, %v66
    %v68 = vpop.f32.mrf.mxu0
    %v69 = vpop.f32.mrf.mxu0
    %v70 = vadd.f32 0.0, %v69
    %v71 = vpop.f32.mrf.mxu0
    %72 = vdwg.mxu0
    %v73 = vld [vmem:[%s2] sm:$0xff]
    %v74 = vld [vmem:[%s2 + $0x8] sm:$0xff]
    %v75 = vld [vmem:[%s3] sm:$0xff]
    %v76 = vld [vmem:[%s3 + $0x8] sm:$0xff]
    %78 = vset.pattern.permute.xlu0 0
    %79 = vperm.xlu0 %78, %v73
    %v80 = vpop.permute.xlu0 %79
    %83 = vset.pattern.permute.xlu0 0
    %84 = vperm.xlu0 %83, %v74
    %v85 = vpop.permute.xlu0 %84
    %v87 = vmul.f32 %v67, %v80
    %v88 = vmul.f32 %v70, %v85
    %91 = vset.pattern.permute.xlu0 0
    %92 = vperm.xlu0 %91, %v75
    %v93 = vpop.permute.xlu0 %92
    %94 = vset.pattern.permute.xlu0 0
    %95 = vperm.xlu0 %94, %v76
    %v96 = vpop.permute.xlu0 %95
    %v97 = vlaneseq
    %v98 = vand.u32 %v97, 127
    %v99 = vlaneseq
    %v100 = vshrl.u32 %v99, 7
    %v101 = vsub.s32 %v98, %v100
    %v102 = vrot.slane %v93, %v101
    %v103 = vadd.s32 %v98, 4294967288
    %v104 = vlaneseq
    %v105 = vshrl.u32 %v104, 7
    %v106 = vsub.s32 %v103, %v105
    %v107 = vrot.slane %v96, %v106
    %vm108 = vcmask 130112
    %v109 = vsel %vm108, %v107, %v102
    %vm110 = vcmask 1042434
    %v111 = vsel %vm110, %v109, %v109
    %vm112 = vcmask 1043459
    %v113 = vsel %vm112, %v109, %v111
    %vm114 = vcmask 1044484
    %v115 = vsel %vm114, %v109, %v113
    %vm116 = vcmask 1045509
    %v117 = vsel %vm116, %v109, %v115
    %vm118 = vcmask 1046534
    %v119 = vsel %vm118, %v109, %v117
    %vm120 = vcmask 1047559
    %v121 = vsel %vm120, %v109, %v119
    %v123 = vmul.f32 %v87, %v121
    %v124 = vmul.f32 %v88, %v121
    %vm125 = vcmask 130048
    %v126 = vsel %vm125, %v123, -inf
    %v127 = vsel %vm125, %v124, -inf
    %v128 = vmax.f32 %v126, %v127
    %129 = vmax.xlane.f32.xlu0 %v128
    %v130 = vpop.xlane.xlu0 %129
    %v131 = vrot.slane %v130, 4
    %v132 = vmax.f32 %v130, %v131
    %v133 = vrot.slane %v132, 2
    %v134 = vmax.f32 %v132, %v133
    %v135 = vrot.slane %v134, 1
    %v136 = vmax.f32 %v134, %v135
    %s137 = vtos %v136
    %v138 = vstv %s137
    %v139 = vsub.f32 %v123, %v138
    %v140 = vsub.f32 %v124, %v138
    %v141 = vmul.f32 %v139, 1.442695
    %v142 = vpow.pop %v141
    %v143 = vmul.f32 %v140, 1.442695
    %v144 = vpow.pop %v143
    %v145 = vsel %vm125, %v142, 0.0
    %146 = vadd.xlane.f32.xlu0 %v145
    %v147 = vpop.xlane.xlu0 %146
    %v148 = vsel %vm125, %v144, 0.0
    %149 = vadd.xlane.f32.xlu0 %v148
    %v150 = vpop.xlane.xlu0 %149
    %v151 = vadd.f32 %v145, %v148
    %v152 = vrot.slane %v151, 4
    %v153 = vadd.f32 %v151, %v152
    %v154 = vrot.slane %v153, 2
    %v155 = vadd.f32 %v153, %v154
    %v156 = vrot.slane %v155, 1
    %v157 = vadd.f32 %v155, %v156
    %v158 = vlaneseq
    %v159 = vshrl.u32 %v158, 7
    %v160 = vadd.s32 %v159, 8
    %vm161 = vcmp.eq.s32.totalorder %v159, %v98
    %vm162 = vcmp.eq.s32.totalorder %v160, %v98
    %v163 = vsel %vm161, %v123, 0.0
    %v164 = vsel %vm162, %v124, 0.0
    %v165 = vsel %vm125, %v163, 0.0
    %v166 = vsel %vm125, %v164, 0.0
    %v167 = vadd.f32 %v165, %v166
    %168 = vadd.xlane.f32.xlu0 %v167
    %v169 = vpop.xlane.xlu0 %168
    %v170 = vrot.slane %v169, 4
    %v171 = vadd.f32 %v169, %v170
    %v172 = vrot.slane %v171, 2
    %v173 = vadd.f32 %v171, %v172
    %v174 = vrot.slane %v173, 1
    %v175 = vadd.f32 %v173, %v174
    %s176 = vtos %v175
    %p177 = scmp.eq.s32.totalorder 0, 0
    %s178 = scalar_select %p177, %s176, 0.0
    %v181 = vlaneseq
    %v182 = vshrl.u32 %v181, 7
    %v183 = vsub.s32 %v98, %v182
    %v184 = vrot.slane %v147, %v183
    %v185 = vlaneseq
    %v186 = vshrl.u32 %v185, 7
    %v187 = vsub.s32 %v103, %v186
    %v188 = vrot.slane %v150, %v187
    %v189 = vsel %vm108, %v188, %v184
    %vm191 = vcmask 122880
    %192 = vst.msk [vmem:[#allocation2] sm:$0x1] %vm191, %v189
    %193 = vst.msk [vmem:[#allocation2 + $0x1] sm:$0x1] %vm191, %v157
    %194 = vst.msk [vmem:[#allocation2 + $0x2] sm:$0x1] %vm191, %v138
    %v195 = vstv %s178
    %196 = vst.msk [vmem:[#allocation2 + $0x3] sm:$0x1] %vm191, %v195
    // Predicated region
    $region18: #{tpu_custom_call.1} parent=1 // pred_check
      _
    $region19: #{tpu_custom_call.1} parent=1 // pred_check_branch
      %198 = sbr.rel (0) target = $region21
    $region20: #{tpu_custom_call.1} parent=1 // pred_region
      %s200 = ssub.s32 64, 64
      %201 = vsyncadd [#allocation3], %s200
      %s203 = sshll.u32 [#allocation2], 4
      %s204 = int_to_ptr.vmem [resolvable:$true] %s203
      %206 = dma.vmem_to_hbm [thread:$0]  %s204, 64, %s4, [#allocation3]
    $region21: #{tpu_custom_call.1} parent=1 // pred_fallthru
      _
    // Predicated region
    $region22: #{tpu_custom_call.1} parent=1 // pred_check
      _
    $region23: #{tpu_custom_call.1} parent=1 // pred_check_branch
      %208 = sbr.rel (0) target = $region25
    $region24: #{tpu_custom_call.1} parent=1 // pred_region
      %209 = dma.done [#allocation3], 64
    $region25: #{tpu_custom_call.1} parent=1 // pred_fallthru
      _
    %210 = vsyncpa [#allocation3], 1

</llo_original>
